<compile_context>
chip_gen: v5e
topology: v5e:2x2
jax: 0.10.0
libtpu: 0.0.40
codegen_flags: <defaults>
</compile_context>

<pallas_src>
import functools

import jax
import jax.numpy as jnp
from jax.experimental import pallas as pl
from jax.experimental.pallas import tpu as pltpu


def _round_up(x: int, m: int) -> int:
    return ((x + m - 1) // m) * m


def _accuracy_kernel(pred_ref, label_ref, count_ref, *, num_classes: int,
                     batch: int, tile_b: int, chunk: int):
    i = pl.program_id(0)
    is_float = jnp.issubdtype(pred_ref.dtype, jnp.floating)

    # Chunked first-occurrence argmax over the class (lane) axis, carried as
    # per-row (running_max, running_first_max_index). Native dtype throughout.
    run_max = None
    run_idx = None
    for start in range(0, num_classes, chunk):
        width = min(chunk, num_classes - start)
        vals = pred_ref[:, start:start + width]                    # (TB, width)
        col = jax.lax.broadcasted_iota(jnp.int32, (1, width), 1) + start
        cmax = jnp.max(vals, axis=-1, keepdims=True)               # (TB, 1)
        hit = vals == cmax
        if is_float:
            # torch.argmax treats NaN as the maximum: a NaN row has cmax=NaN,
            # `vals == cmax` is all-False and the isnan mask picks the first
            # NaN index in this chunk.
            hit = hit | jnp.isnan(vals)
        cidx = jnp.min(jnp.where(hit, col, num_classes),
                       axis=-1, keepdims=True)                     # (TB, 1)
        if run_max is None:
            run_max, run_idx = cmax, cidx
        else:
            if is_float:
                # Earlier NaN always wins (lower index); new NaN beats any
                # finite running max; otherwise strict > keeps first occurrence.
                newer = (~jnp.isnan(run_max)) & (jnp.isnan(cmax) |
                                                 (cmax > run_max))
            else:
                newer = cmax > run_max
            run_max = jnp.where(newer, cmax, run_max)
            run_idx = jnp.where(newer, cidx, run_idx)

    # Mask rows that fall past the true batch size (last partial tile).
    row = jax.lax.broadcasted_iota(jnp.int32, (tile_b, 1), 0)
    valid = (i * tile_b + row) < batch                              # (TB, 1)

    correct = jnp.where(valid & (run_idx == label_ref[...]), 1, 0)  # int32
    count_ref[0, 0] = jnp.sum(correct).astype(jnp.int32)


def accuracy(prediction: jax.Array, label: jax.Array,
             tile_b: int | None = None) -> jax.Array:
    """prediction: (B, C) float, label: (B,) int -> scalar float32 accuracy."""
    B, C = prediction.shape
    label2d = label.reshape(B, 1).astype(jnp.int32)

    itemsize = jnp.dtype(prediction.dtype).itemsize
    sub = {4: 8, 2: 16, 1: 32}.get(itemsize, 8)   # dtype sublane packing unit
    c_pad = _round_up(C, 128)                      # lanes actually streamed
    b_pad = _round_up(B, 8)

    if tile_b is None:
        # ~2 MiB of *padded* prediction bytes per pipeline buffer (the measured
        # HBM-roofline tile sweep plateaus ~85% at >=1 MiB tiles); 4096-row cap
        # bounds the lane-padded (TB,128) per-row temporaries and label block.
        tile_b = (2 * 1024 * 1024) // (c_pad * itemsize)
        tile_b = max(sub, min(4096, (tile_b // sub) * sub))
        # v7x megacore: make sure the "parallel" batch axis has >= 2 grid steps
        # whenever the batch is big enough to be worth splitting.
        if tile_b >= b_pad and B >= 2 * sub:
            tile_b = _round_up(pl.cdiv(B, 2), sub)
    tile_b = max(8, (min(tile_b, b_pad) // 8) * 8)
    grid = pl.cdiv(B, tile_b)
    chunk = min(c_pad, 512)

    # Explicit VMEM budget: double-buffered prediction + (lane-padded) label
    # blocks, per-chunk temporaries, and lane-padded (TB,1) running stats.
    vmem_bytes = (2 * tile_b * c_pad * itemsize
                  + 2 * tile_b * 128 * 4
                  + tile_b * chunk * (itemsize + 8)
                  + 8 * tile_b * 128 * 4)
    vmem_limit = int(min(48 * 1024 * 1024,
                         max(16 * 1024 * 1024, int(vmem_bytes * 1.5))))

    counts = pl.pallas_call(
        functools.partial(_accuracy_kernel, num_classes=C, batch=B,
                          tile_b=tile_b, chunk=chunk),
        out_shape=jax.ShapeDtypeStruct((grid, 1), jnp.int32),
        grid=(grid,),
        in_specs=[
            pl.BlockSpec((tile_b, C), lambda i: (i, 0)),   # prediction tile
            pl.BlockSpec((tile_b, 1), lambda i: (i, 0)),   # label tile
        ],
        out_specs=pl.BlockSpec((1, 1), lambda i: (i, 0),
                               memory_space=pltpu.MemorySpace.SMEM),
        compiler_params=pltpu.CompilerParams(
            dimension_semantics=("parallel",),
            vmem_limit_bytes=vmem_limit),
        cost_estimate=pl.CostEstimate(
            flops=0,                                   # no MXU involvement
            transcendentals=0,
            bytes_accessed=grid * tile_b * c_pad * itemsize + B * 4 + grid * 4),
    )(prediction, label2d)

    # Tiny exact integer reduction + normalization in the wrapper.
    return jnp.sum(counts).astype(jnp.float32) / jnp.float32(B)


def _reference(prediction, label):
    return (jnp.argmax(prediction, axis=-1) == label).sum().astype(
        jnp.float32) / jnp.float32(prediction.shape[0])


if __name__ == "__main__":
    key = jax.random.PRNGKey(0)

    # Case 1: spec-sized f32 inputs (batch=8, classes=32), single block.
    k_pred, k_lab = jax.random.split(key)
    B, C = 8, 32
    prediction = jax.random.normal(k_pred, (B, C), dtype=jnp.float32)
    label = jax.random.randint(k_lab, (B,), 0, C, dtype=jnp.int32)
    acc = accuracy(prediction, label)
    jax.block_until_ready(acc)
    ref = _reference(prediction, label)
    assert jnp.allclose(acc, ref), (acc, ref)

    # Case 2: bf16 inputs, batch not a multiple of the tile, multi-step grid
    # (native-dtype compute, partial-tile masking, pipelining).
    k_pred2, k_lab2 = jax.random.split(jax.random.PRNGKey(1))
    B2, C2 = 50, 96
    prediction2 = jax.random.normal(k_pred2, (B2, C2), dtype=jnp.bfloat16)
    label2 = jax.random.randint(k_lab2, (B2,), 0, C2, dtype=jnp.int32)
    acc2 = accuracy(prediction2, label2, tile_b=16)
    jax.block_until_ready(acc2)
    ref2 = _reference(prediction2, label2)
    assert jnp.allclose(acc2, ref2), (acc2, ref2)

    # Case 3: class count > chunk (1152 = 3 chunks), exercising the chunked
    # argmax carry, a cross-chunk tie (first occurrence wins) and a NaN row
    # (torch semantics: index of the first NaN), plus a 2-step partial grid.
    k_pred3, k_lab3 = jax.random.split(jax.random.PRNGKey(2))
    B3, C3 = 24, 1152
    prediction3 = jax.random.normal(k_pred3, (B3, C3), dtype=jnp.float32)
    prediction3 = prediction3.at[0, 100].set(50.0).at[0, 900].set(50.0)
    prediction3 = prediction3.at[1, 3].set(100.0).at[1, 777].set(jnp.nan)
    label3 = jax.random.randint(k_lab3, (B3,), 0, C3, dtype=jnp.int32)
    label3 = label3.at[0].set(100).at[1].set(777)
    acc3 = accuracy(prediction3, label3)
    jax.block_until_ready(acc3)
    # Reference with torch NaN semantics imposed by hand (row 1 -> index 777).
    ref_idx = jnp.argmax(jnp.where(jnp.isnan(prediction3), -jnp.inf,
                                   prediction3), axis=-1)
    ref_idx = ref_idx.at[1].set(777)
    ref3 = (ref_idx == label3).sum().astype(jnp.float32) / jnp.float32(B3)
    assert jnp.allclose(acc3, ref3), (acc3, ref3)

    print("KERNEL_OK")
</pallas_src>

<mosaic_0001>
module attributes {stable_mosaic.version = 11 : i64} {
  func.func @_accuracy_kernel(%arg0: i32, %arg1: memref<8x32xf32, #tpu.memory_space<vmem>>, %arg2: memref<8x1xi32, #tpu.memory_space<vmem>>, %arg3: memref<1x1xi32, #tpu.memory_space<smem>>) attributes {dimension_semantics = [#tpu.dimension_semantics<parallel>], iteration_bounds = array<i64: 1>, scalar_prefetch = 0 : i64, scratch_operands = 0 : i64, tpu.core_type = #tpu.core_type<tc>, window_params = [{transform_indices = @transform_0, window_bounds = array<i64: 8, 32>}, {transform_indices = @transform_1, window_bounds = array<i64: 8, 1>}, {transform_indices = @transform_2, window_bounds = array<i64: 1, 1>}]} {
    %c0 = arith.constant 0 : index
    %c0_0 = arith.constant 0 : index
    %0 = vector.load %arg1[%c0, %c0_0] : memref<8x32xf32, #tpu.memory_space<vmem>>, vector<8x32xf32>
    %1 = tpu.iota {dimensions = array<i32: 1>} : vector<1x32xi32>
    %c0_i32 = arith.constant 0 : i32
    %2 = vector.broadcast %c0_i32 : i32 to vector<1x32xi32>
    %3 = arith.addi %1, %2 : vector<1x32xi32>
    %cst = arith.constant dense<0xFF800000> : vector<8xf32>
    %4 = vector.multi_reduction <maximumf>, %0, %cst [1] : vector<8x32xf32> to vector<8xf32>
    %5 = vector.shape_cast %4 : vector<8xf32> to vector<8x1xf32>
    %6 = vector.broadcast %5 : vector<8x1xf32> to vector<8x32xf32>
    %7 = arith.cmpf oeq, %0, %6 : vector<8x32xf32>
    %8 = arith.cmpf one, %0, %0 : vector<8x32xf32>
    %9 = arith.ori %7, %8 : vector<8x32xi1>
    %c32_i32 = arith.constant 32 : i32
    %10 = vector.shape_cast %3 : vector<1x32xi32> to vector<1x32xi32>
    %11 = vector.broadcast %10 : vector<1x32xi32> to vector<8x32xi32>
    %12 = vector.broadcast %c32_i32 : i32 to vector<8x32xi32>
    %13 = arith.select %9, %11, %12 : vector<8x32xi1>, vector<8x32xi32>
    %cst_1 = arith.constant dense<2147483647> : vector<8xi32>
    %14 = vector.multi_reduction <minsi>, %13, %cst_1 [1] : vector<8x32xi32> to vector<8xi32>
    %15 = vector.shape_cast %14 : vector<8xi32> to vector<8x1xi32>
    %16 = tpu.iota {dimensions = array<i32: 0>} : vector<8x1xi32>
    %c8_i32 = arith.constant 8 : i32
    %17 = arith.muli %arg0, %c8_i32 : i32
    %18 = vector.broadcast %17 : i32 to vector<8x1xi32>
    %19 = arith.addi %18, %16 : vector<8x1xi32>
    %c8_i32_2 = arith.constant 8 : i32
    %20 = vector.broadcast %c8_i32_2 : i32 to vector<8x1xi32>
    %21 = arith.cmpi slt, %19, %20 : vector<8x1xi32>
    %c0_3 = arith.constant 0 : index
    %c0_4 = arith.constant 0 : index
    %22 = vector.load %arg2[%c0_3, %c0_4] : memref<8x1xi32, #tpu.memory_space<vmem>>, vector<8x1xi32>
    %23 = arith.cmpi eq, %15, %22 : vector<8x1xi32>
    %24 = arith.andi %21, %23 : vector<8x1xi1>
    %c1_i32 = arith.constant 1 : i32
    %c0_i32_5 = arith.constant 0 : i32
    %25 = vector.broadcast %c1_i32 : i32 to vector<8x1xi32>
    %26 = vector.broadcast %c0_i32_5 : i32 to vector<8x1xi32>
    %27 = arith.select %24, %25, %26 : vector<8x1xi1>, vector<8x1xi32>
    %28 = vector.shape_cast %27 : vector<8x1xi32> to vector<1x8x1xi32>
    %cst_6 = arith.constant dense<0> : vector<1xi32>
    %29 = vector.multi_reduction <add>, %28, %cst_6 [1, 2] : vector<1x8x1xi32> to vector<1xi32>
    %30 = vector.shape_cast %29 : vector<1xi32> to vector<1x1x1xi32>
    %31 = vector.extract %30[0, 0, 0] : i32 from vector<1x1x1xi32>
    %c0_7 = arith.constant 0 : index
    %c0_8 = arith.constant 0 : index
    %32 = memref.load %arg3[%c0_7, %c0_8] : memref<1x1xi32, #tpu.memory_space<smem>>
    memref.store %31, %arg3[%c0_7, %c0_8] : memref<1x1xi32, #tpu.memory_space<smem>>
    return
  }
  func.func @transform_0(%arg0: i32) -> (i32, i32) {
    %c0_i32 = arith.constant 0 : i32
    %c0_i32_0 = arith.constant 0 : i32
    return %arg0, %c0_i32 : i32, i32
  }
  func.func @transform_1(%arg0: i32) -> (i32, i32) {
    %c0_i32 = arith.constant 0 : i32
    %c0_i32_0 = arith.constant 0 : i32
    return %arg0, %c0_i32 : i32, i32
  }
  func.func @transform_2(%arg0: i32) -> (i32, i32) {
    %c0_i32 = arith.constant 0 : i32
    %c0_i32_0 = arith.constant 0 : i32
    return %arg0, %c0_i32 : i32, i32
  }
}

</mosaic_0001>

<llo_original>
// kernel: tpu_custom_call.1
$region0: #{tpu_custom_call.1}
  #allocation0 [shape = 'u32[]', space=smem, size = 0x4, offset = 0x4, fixed_abs, tag = 'smem constant byte address 0x4 - core index']
  #allocation1 [shape = 'u32[72,128]{1,0:T(1,128)}', space=vmem, size = 0x9000, scoped, tag = 'internal scratch']
  %s0 = inlined_call_operand.vmem [shape: f32[8,32], index: 0, kind: input, shape index: {}]
  %s1 = inlined_call_operand.vmem [shape: s32[8,1], index: 1, kind: input, shape index: {}]
  %s2 = inlined_call_operand.hbm [shape: s32[1,1], index: 2, kind: output, shape index: {}]
  %s3 = sld [smem:[#allocation0]]
  $region18: #{tpu_custom_call.1} parent=0
    _
  %s5 = ssub.s32 1, %s3
  %s6 = scalar_select 0, %s5, %s3
  $region1: #{tpu_custom_call.1} parent=0
    #allocation2 [shape = 'u8[512]{0}', space=smem, size = 0x200, scoped, tag = 'output window, operand 0, single buffered']
    #allocation3 [shape = 's32[1]{0}', space=sflag, size = 0x4, scoped, tag = 'scoped memory for tpu_custom_call.1']
    %7 = vsyncpa [#allocation3], 0
    // Predicated region
    $region2: #{tpu_custom_call.1} parent=1 // pred_check
      _
    $region3: #{tpu_custom_call.1} parent=1 // pred_check_branch
      %9 = sbr.rel (0) target = $region5
    $region4: #{tpu_custom_call.1} parent=1 // pred_region
      _
    $region5: #{tpu_custom_call.1} parent=1 // pred_fallthru
      _
    // Predicated region
    $region6: #{tpu_custom_call.1} parent=1 // pred_check
      _
    $region7: #{tpu_custom_call.1} parent=1 // pred_check_branch
      %11 = sbr.rel (0) target = $region9
    $region8: #{tpu_custom_call.1} parent=1 // pred_region
      _
    $region9: #{tpu_custom_call.1} parent=1 // pred_fallthru
      _
    %v12 = vld [vmem:[%s0] sm:$0xff]
    %v13 = vlaneseq
    %v14 = vand.u32 %v13, 127
    %vm15 = vcmask 261120
    %v16 = vsel %vm15, %v12, -inf
    %17 = vmax.xlane.f32.xlu0 %v16
    %v18 = vpop.xlane.xlu0 %17
    %vm19 = vcmp.eq.f32.partialorder %v12, %v18
    %vm20 = vcmp.ne.f32.partialorder %v12, %v12
    %vm21 = vmor %vm19, %vm20
    %v22 = vsel %vm21, %v14, 32
    %v23 = vsel %vm15, %v22, 2147483647
    %v24 = vand.u32 %v23, 65535
    %v25 = vshra.s32 %v23, 16
    %v26 = vcvt.s32.f32 %v24
    %v27 = vcvt.s32.f32 %v25
    %28 = vmin.xlane.f32.xlu0 %v27
    %v29 = vpop.xlane.xlu0 %28
    %vm30 = vcmp.eq.f32.partialorder %v27, %v29
    %v31 = vsel %vm30, %v26, inf
    %32 = vmin.xlane.f32.xlu0 %v31
    %v33 = vpop.xlane.xlu0 %32
    %v34 = vcvt.f32.s32 %v33
    %v35 = vcvt.f32.s32 %v29
    %v36 = vshll.u32 %v35, 16
    %v37 = vadd.s32 %v36, %v34
    %v38 = vlaneseq
    %v39 = vshrl.u32 %v38, 7
    %s40 = smul.u32 0, 8
    %v41 = vstv %s40
    %v42 = vadd.s32 %v41, %v39
    %vm43 = vcmp.lt.s32.totalorder %v42, 8
    %v44 = vld [vmem:[%s1] sm:$0xff]
    %vm45 = vcmp.eq.s32.totalorder %v37, %v44
    %vm46 = vmand %vm43, %vm45
    %v47 = vsel %vm46, 1, 0
    %vm48 = vcmask 7168
    %v49 = vsel %vm48, %v47, 0
    %v50 = vand.u32 %v49, 65535
    %v51 = vshrl.u32 %v49, 16
    %v52 = vcvt.s32.f32 %v50
    %v53 = vcvt.s32.f32 %v51
    %54 = vadd.xlane.f32.xlu0 %v52
    %v55 = vpop.xlane.xlu0 %54
    %56 = vadd.xlane.f32.xlu0 %v53
    %v57 = vpop.xlane.xlu0 %56
    %v58 = vcvt.f32.s32 %v55
    %v59 = vcvt.f32.s32 %v57
    %v60 = vshll.u32 %v59, 16
    %v61 = vadd.s32 %v60, %v58
    %v62 = vrot.slane %v61, 4
    %v63 = vadd.s32 %v61, %v62
    %v64 = vrot.slane %v63, 2
    %v65 = vadd.s32 %v63, %v64
    %v66 = vrot.slane %v65, 1
    %v67 = vadd.s32 %v65, %v66
    %s68 = vtos %v67
    %s69 = scalar_lea.smem [#allocation2], 0
    %70 = sst [smem:[%s69]] %s68
    // Predicated region
    $region10: #{tpu_custom_call.1} parent=1 // pred_check
      _
    $region11: #{tpu_custom_call.1} parent=1 // pred_check_branch
      %72 = sbr.rel (0) target = $region13
    $region12: #{tpu_custom_call.1} parent=1 // pred_region
      %74 = vsyncadd [#allocation3], 0
      %s76 = sshll.u32 %s2, 4
      %s77 = int_to_ptr.hbm [resolvable:$true] %s76
      %79 = dma.smem_to_hbm [#allocation2], 16, %s77, [#allocation3]
    $region13: #{tpu_custom_call.1} parent=1 // pred_fallthru
      _
    // Predicated region
    $region14: #{tpu_custom_call.1} parent=1 // pred_check
      _
    $region15: #{tpu_custom_call.1} parent=1 // pred_check_branch
      %81 = sbr.rel (0) target = $region17
    $region16: #{tpu_custom_call.1} parent=1 // pred_region
      %83 = dma.done [#allocation3], 16
    $region17: #{tpu_custom_call.1} parent=1 // pred_fallthru
      _
    %84 = sfence
    %85 = vsyncpa [#allocation3], 1

</llo_original>
